<compile_context>
chip_gen: v7x
topology: tpu7x:2x2x1
jax: 0.10.0
libtpu: 0.0.40
codegen_flags: <defaults>
</compile_context>

<pallas_src>
import math

import jax
import jax.numpy as jnp
from jax import lax
from jax.experimental import pallas as pl
from jax.experimental.pallas import tpu as pltpu

_INV_SQRT2 = 1.0 / math.sqrt(2.0)
_LANE = 128
_SUB = 8
_BLOCK_ELEMS = _SUB * _LANE  # 1024


def _make_kernel(K):
    """Kernel for K mixture components (K is a static Python int)."""

    def kernel(scal_ref, x_ref, o_ref):
        # SMEM scalar layout:
        #   [0] k      = 1/(sigma*sqrt2)
        #   [1] s'     = sigma/sqrt2
        #   [2] B1     = sum_j 0.5*pi_j*exp(mu_j + sig^2/2 - r*tau)
        #   [3] B2     = 0.5*exp(-r*tau)
        #   [4      .. 4+K-1 ]  a'_j = (mu_j + sig^2)/(sigma*sqrt2)
        #   [4+K    .. 4+2K-1]  e1_j = 0.5*pi_j*exp(mu_j + sig^2/2 - r*tau)
        #   [4+2K   .. 4+3K-1]  e2_j = 0.5*pi_j*exp(-r*tau)
        k_fold = scal_ref[0]
        sig_p = scal_ref[1]
        b1 = scal_ref[2]
        b2 = scal_ref[3]

        x = x_ref[...]                      # (tile_r, 128) strikes, fully packed
        z = jnp.log(x) * k_fold             # ln(X)/(sigma*sqrt2), computed once

        # j = 0 peeled; bases B1/B2 folded into the initial accumulators.
        u = scal_ref[4] - z
        s1 = b1 + scal_ref[4 + K] * lax.erf(u)
        s2 = b2 + scal_ref[4 + 2 * K] * lax.erf(u - sig_p)
        for j in range(1, K):               # unrolled; scalars are immediates
            u = scal_ref[4 + j] - z
            s1 = s1 + scal_ref[4 + K + j] * lax.erf(u)
            s2 = s2 + scal_ref[4 + 2 * K + j] * lax.erf(u - sig_p)

        o_ref[...] = s1 - x * s2

    return kernel


def c_mixg_pallas(X, r, tau, sigma, mu, pi, *, max_rows=512):
    """Mixture-of-lognormals call price.  X: (M,) f32 strikes -> (M,) prices."""
    M = int(X.shape[0])
    K = int(mu.shape[0])

    X = X.astype(jnp.float32)
    mu = mu.astype(jnp.float32)
    pi = pi.astype(jnp.float32)
    sigma = jnp.asarray(sigma, jnp.float32)
    r = jnp.float32(r)
    tau = jnp.float32(tau)

    # ---- scalar-only precompute (folds all affine/constant work out) ----
    sig2 = sigma * sigma
    inv_sigma = 1.0 / sigma
    disc = jnp.exp(-r * tau)
    fwd = jnp.exp(mu + 0.5 * sig2 - r * tau)            # (K,)
    k_fold = inv_sigma * jnp.float32(_INV_SQRT2)
    sig_p = sigma * jnp.float32(_INV_SQRT2)
    a_p = (mu + sig2) * k_fold                           # (K,)
    e1 = 0.5 * pi * fwd                                  # (K,)
    e2 = 0.5 * pi * disc                                 # (K,)
    b1 = jnp.sum(e1)
    b2 = 0.5 * disc                                      # sum(pi) == 1
    scal = jnp.concatenate(
        [jnp.stack([k_fold, sig_p, b1, b2]), a_p, e1, e2]).astype(jnp.float32)

    # ---- dense (rows, 128) layout; rows padded to a multiple of 8 ----
    Mp = pl.cdiv(M, _BLOCK_ELEMS) * _BLOCK_ELEMS
    R = Mp // _LANE                                      # multiple of 8
    # tile_r: multiple of 8, <= max_rows, and giving >= 2 grid steps whenever
    # R >= 16 so the "parallel" axis can shard across v7x's 2 TensorCores.
    half8 = pl.cdiv(pl.cdiv(R, 2), _SUB) * _SUB
    tile_r = min(max_rows, max(_SUB, half8))
    Rp = pl.cdiv(R, tile_r) * tile_r
    grid = (Rp // tile_r,)

    pad = Rp * _LANE - M
    if pad:
        # pad with strike 1.0 so log() is finite; padded lanes discarded below
        xp = jnp.concatenate([X, jnp.ones((pad,), jnp.float32)])
    else:
        xp = X
    x2 = xp.reshape(Rp, _LANE)

    grid_spec = pltpu.PrefetchScalarGridSpec(
        num_scalar_prefetch=1,
        grid=grid,
        in_specs=[pl.BlockSpec((tile_r, _LANE), lambda i, s: (i, 0))],
        out_specs=pl.BlockSpec((tile_r, _LANE), lambda i, s: (i, 0)),
    )

    n_elems = Rp * _LANE
    cost = pl.CostEstimate(
        flops=(12 * K + 12) * n_elems,
        transcendentals=(2 * K + 1) * n_elems,
        bytes_accessed=8 * n_elems,
    )

    out = pl.pallas_call(
        _make_kernel(K),
        out_shape=jax.ShapeDtypeStruct((Rp, _LANE), jnp.float32),
        grid_spec=grid_spec,
        compiler_params=pltpu.CompilerParams(
            dimension_semantics=("parallel",)),
        cost_estimate=cost,
    )(scal, x2)

    return out.reshape(Rp * _LANE)[:M]


def c_mixg_ref(X, r, tau, sigma, mu, pi):
    """Pure-JAX reference for validation."""
    logx = jnp.log(X)[None, :]                     # (1, M)
    mu_c = mu[:, None]                             # (K, 1)
    pi_c = pi[:, None]
    sig2 = sigma * sigma
    d1 = (mu_c - logx + sig2) / sigma
    d2 = d1 - sigma
    phi1 = 0.5 * (1.0 + lax.erf(d1 * _INV_SQRT2))
    phi2 = 0.5 * (1.0 + lax.erf(d2 * _INV_SQRT2))
    term = jnp.exp(mu_c + 0.5 * sig2 - r * tau) * phi1 \
        - X[None, :] * jnp.exp(-r * tau) * phi2
    return jnp.sum(pi_c * term, axis=0)


if __name__ == "__main__":
    key = jax.random.PRNGKey(0)
    k_mu, k_x = jax.random.split(key)

    # ---- module __init__ (deterministic, synthetic) ----
    n = 7                               # args.n  -> K = n + 1 = 8 components
    K = n + 1
    r = 0.05                            # args.r
    tau = 0.5                           # args.tau
    d = 0.02                            # args.d (unused in forward)
    pi_raw = jnp.ones((K,), dtype=jnp.float32)
    pi = jax.nn.softmax(pi_raw, axis=0)                      # property `pi`
    mu = jax.random.uniform(k_mu, (K,), dtype=jnp.float32,
                            minval=7.107, maxval=7.265)
    sigma = jnp.float32(0.07)

    # ---- forward input: vector of strikes ----
    M = 256
    X = jax.random.uniform(k_x, (M,), dtype=jnp.float32,
                           minval=1000.0, maxval=1600.0)

    out = c_mixg_pallas(X, r, tau, sigma, mu, pi)
    out = jax.block_until_ready(out)

    ref = c_mixg_ref(X, jnp.float32(r), jnp.float32(tau), sigma, mu, pi)
    assert out.shape == (M,)
    assert jnp.allclose(out, ref, rtol=1e-4, atol=1e-2), \
        f"max abs err {jnp.max(jnp.abs(out - ref))}"

    print("KERNEL_OK")
</pallas_src>

<mosaic_0001>
module attributes {stable_mosaic.version = 11 : i64} {
  func.func @kernel(%arg0: i32, %arg1: memref<28xf32, #tpu.memory_space<smem>>, %arg2: memref<8x128xf32, #tpu.memory_space<vmem>>, %arg3: memref<8x128xf32, #tpu.memory_space<vmem>>) attributes {dimension_semantics = [#tpu.dimension_semantics<parallel>], iteration_bounds = array<i64: 1>, scalar_prefetch = 1 : i64, scratch_operands = 0 : i64, tpu.core_type = #tpu.core_type<tc>, window_params = [{transform_indices = @transform_0, window_bounds = array<i64: 8, 128>}, {transform_indices = @transform_1, window_bounds = array<i64: 8, 128>}]} {
    %c0 = arith.constant 0 : index
    %0 = memref.load %arg1[%c0] : memref<28xf32, #tpu.memory_space<smem>>
    %c1 = arith.constant 1 : index
    %1 = memref.load %arg1[%c1] : memref<28xf32, #tpu.memory_space<smem>>
    %c2 = arith.constant 2 : index
    %2 = memref.load %arg1[%c2] : memref<28xf32, #tpu.memory_space<smem>>
    %c3 = arith.constant 3 : index
    %3 = memref.load %arg1[%c3] : memref<28xf32, #tpu.memory_space<smem>>
    %c0_0 = arith.constant 0 : index
    %c0_1 = arith.constant 0 : index
    %4 = vector.load %arg2[%c0_0, %c0_1] : memref<8x128xf32, #tpu.memory_space<vmem>>, vector<8x128xf32>
    %5 = math.log %4 : vector<8x128xf32>
    %6 = vector.broadcast %0 : f32 to vector<8x128xf32>
    %7 = arith.mulf %5, %6 : vector<8x128xf32>
    %c4 = arith.constant 4 : index
    %8 = memref.load %arg1[%c4] : memref<28xf32, #tpu.memory_space<smem>>
    %9 = vector.broadcast %8 : f32 to vector<8x128xf32>
    %10 = arith.subf %9, %7 : vector<8x128xf32>
    %c12 = arith.constant 12 : index
    %11 = memref.load %arg1[%c12] : memref<28xf32, #tpu.memory_space<smem>>
    %12 = math.erf %10 : vector<8x128xf32>
    %13 = vector.broadcast %11 : f32 to vector<8x128xf32>
    %14 = arith.mulf %13, %12 : vector<8x128xf32>
    %15 = vector.broadcast %2 : f32 to vector<8x128xf32>
    %16 = arith.addf %15, %14 : vector<8x128xf32>
    %c20 = arith.constant 20 : index
    %17 = memref.load %arg1[%c20] : memref<28xf32, #tpu.memory_space<smem>>
    %18 = vector.broadcast %1 : f32 to vector<8x128xf32>
    %19 = arith.subf %10, %18 : vector<8x128xf32>
    %20 = math.erf %19 : vector<8x128xf32>
    %21 = vector.broadcast %17 : f32 to vector<8x128xf32>
    %22 = arith.mulf %21, %20 : vector<8x128xf32>
    %23 = vector.broadcast %3 : f32 to vector<8x128xf32>
    %24 = arith.addf %23, %22 : vector<8x128xf32>
    %c5 = arith.constant 5 : index
    %25 = memref.load %arg1[%c5] : memref<28xf32, #tpu.memory_space<smem>>
    %26 = vector.broadcast %25 : f32 to vector<8x128xf32>
    %27 = arith.subf %26, %7 : vector<8x128xf32>
    %c13 = arith.constant 13 : index
    %28 = memref.load %arg1[%c13] : memref<28xf32, #tpu.memory_space<smem>>
    %29 = math.erf %27 : vector<8x128xf32>
    %30 = vector.broadcast %28 : f32 to vector<8x128xf32>
    %31 = arith.mulf %30, %29 : vector<8x128xf32>
    %32 = arith.addf %16, %31 : vector<8x128xf32>
    %c21 = arith.constant 21 : index
    %33 = memref.load %arg1[%c21] : memref<28xf32, #tpu.memory_space<smem>>
    %34 = vector.broadcast %1 : f32 to vector<8x128xf32>
    %35 = arith.subf %27, %34 : vector<8x128xf32>
    %36 = math.erf %35 : vector<8x128xf32>
    %37 = vector.broadcast %33 : f32 to vector<8x128xf32>
    %38 = arith.mulf %37, %36 : vector<8x128xf32>
    %39 = arith.addf %24, %38 : vector<8x128xf32>
    %c6 = arith.constant 6 : index
    %40 = memref.load %arg1[%c6] : memref<28xf32, #tpu.memory_space<smem>>
    %41 = vector.broadcast %40 : f32 to vector<8x128xf32>
    %42 = arith.subf %41, %7 : vector<8x128xf32>
    %c14 = arith.constant 14 : index
    %43 = memref.load %arg1[%c14] : memref<28xf32, #tpu.memory_space<smem>>
    %44 = math.erf %42 : vector<8x128xf32>
    %45 = vector.broadcast %43 : f32 to vector<8x128xf32>
    %46 = arith.mulf %45, %44 : vector<8x128xf32>
    %47 = arith.addf %32, %46 : vector<8x128xf32>
    %c22 = arith.constant 22 : index
    %48 = memref.load %arg1[%c22] : memref<28xf32, #tpu.memory_space<smem>>
    %49 = vector.broadcast %1 : f32 to vector<8x128xf32>
    %50 = arith.subf %42, %49 : vector<8x128xf32>
    %51 = math.erf %50 : vector<8x128xf32>
    %52 = vector.broadcast %48 : f32 to vector<8x128xf32>
    %53 = arith.mulf %52, %51 : vector<8x128xf32>
    %54 = arith.addf %39, %53 : vector<8x128xf32>
    %c7 = arith.constant 7 : index
    %55 = memref.load %arg1[%c7] : memref<28xf32, #tpu.memory_space<smem>>
    %56 = vector.broadcast %55 : f32 to vector<8x128xf32>
    %57 = arith.subf %56, %7 : vector<8x128xf32>
    %c15 = arith.constant 15 : index
    %58 = memref.load %arg1[%c15] : memref<28xf32, #tpu.memory_space<smem>>
    %59 = math.erf %57 : vector<8x128xf32>
    %60 = vector.broadcast %58 : f32 to vector<8x128xf32>
    %61 = arith.mulf %60, %59 : vector<8x128xf32>
    %62 = arith.addf %47, %61 : vector<8x128xf32>
    %c23 = arith.constant 23 : index
    %63 = memref.load %arg1[%c23] : memref<28xf32, #tpu.memory_space<smem>>
    %64 = vector.broadcast %1 : f32 to vector<8x128xf32>
    %65 = arith.subf %57, %64 : vector<8x128xf32>
    %66 = math.erf %65 : vector<8x128xf32>
    %67 = vector.broadcast %63 : f32 to vector<8x128xf32>
    %68 = arith.mulf %67, %66 : vector<8x128xf32>
    %69 = arith.addf %54, %68 : vector<8x128xf32>
    %c8 = arith.constant 8 : index
    %70 = memref.load %arg1[%c8] : memref<28xf32, #tpu.memory_space<smem>>
    %71 = vector.broadcast %70 : f32 to vector<8x128xf32>
    %72 = arith.subf %71, %7 : vector<8x128xf32>
    %c16 = arith.constant 16 : index
    %73 = memref.load %arg1[%c16] : memref<28xf32, #tpu.memory_space<smem>>
    %74 = math.erf %72 : vector<8x128xf32>
    %75 = vector.broadcast %73 : f32 to vector<8x128xf32>
    %76 = arith.mulf %75, %74 : vector<8x128xf32>
    %77 = arith.addf %62, %76 : vector<8x128xf32>
    %c24 = arith.constant 24 : index
    %78 = memref.load %arg1[%c24] : memref<28xf32, #tpu.memory_space<smem>>
    %79 = vector.broadcast %1 : f32 to vector<8x128xf32>
    %80 = arith.subf %72, %79 : vector<8x128xf32>
    %81 = math.erf %80 : vector<8x128xf32>
    %82 = vector.broadcast %78 : f32 to vector<8x128xf32>
    %83 = arith.mulf %82, %81 : vector<8x128xf32>
    %84 = arith.addf %69, %83 : vector<8x128xf32>
    %c9 = arith.constant 9 : index
    %85 = memref.load %arg1[%c9] : memref<28xf32, #tpu.memory_space<smem>>
    %86 = vector.broadcast %85 : f32 to vector<8x128xf32>
    %87 = arith.subf %86, %7 : vector<8x128xf32>
    %c17 = arith.constant 17 : index
    %88 = memref.load %arg1[%c17] : memref<28xf32, #tpu.memory_space<smem>>
    %89 = math.erf %87 : vector<8x128xf32>
    %90 = vector.broadcast %88 : f32 to vector<8x128xf32>
    %91 = arith.mulf %90, %89 : vector<8x128xf32>
    %92 = arith.addf %77, %91 : vector<8x128xf32>
    %c25 = arith.constant 25 : index
    %93 = memref.load %arg1[%c25] : memref<28xf32, #tpu.memory_space<smem>>
    %94 = vector.broadcast %1 : f32 to vector<8x128xf32>
    %95 = arith.subf %87, %94 : vector<8x128xf32>
    %96 = math.erf %95 : vector<8x128xf32>
    %97 = vector.broadcast %93 : f32 to vector<8x128xf32>
    %98 = arith.mulf %97, %96 : vector<8x128xf32>
    %99 = arith.addf %84, %98 : vector<8x128xf32>
    %c10 = arith.constant 10 : index
    %100 = memref.load %arg1[%c10] : memref<28xf32, #tpu.memory_space<smem>>
    %101 = vector.broadcast %100 : f32 to vector<8x128xf32>
    %102 = arith.subf %101, %7 : vector<8x128xf32>
    %c18 = arith.constant 18 : index
    %103 = memref.load %arg1[%c18] : memref<28xf32, #tpu.memory_space<smem>>
    %104 = math.erf %102 : vector<8x128xf32>
    %105 = vector.broadcast %103 : f32 to vector<8x128xf32>
    %106 = arith.mulf %105, %104 : vector<8x128xf32>
    %107 = arith.addf %92, %106 : vector<8x128xf32>
    %c26 = arith.constant 26 : index
    %108 = memref.load %arg1[%c26] : memref<28xf32, #tpu.memory_space<smem>>
    %109 = vector.broadcast %1 : f32 to vector<8x128xf32>
    %110 = arith.subf %102, %109 : vector<8x128xf32>
    %111 = math.erf %110 : vector<8x128xf32>
    %112 = vector.broadcast %108 : f32 to vector<8x128xf32>
    %113 = arith.mulf %112, %111 : vector<8x128xf32>
    %114 = arith.addf %99, %113 : vector<8x128xf32>
    %c11 = arith.constant 11 : index
    %115 = memref.load %arg1[%c11] : memref<28xf32, #tpu.memory_space<smem>>
    %116 = vector.broadcast %115 : f32 to vector<8x128xf32>
    %117 = arith.subf %116, %7 : vector<8x128xf32>
    %c19 = arith.constant 19 : index
    %118 = memref.load %arg1[%c19] : memref<28xf32, #tpu.memory_space<smem>>
    %119 = math.erf %117 : vector<8x128xf32>
    %120 = vector.broadcast %118 : f32 to vector<8x128xf32>
    %121 = arith.mulf %120, %119 : vector<8x128xf32>
    %122 = arith.addf %107, %121 : vector<8x128xf32>
    %c27 = arith.constant 27 : index
    %123 = memref.load %arg1[%c27] : memref<28xf32, #tpu.memory_space<smem>>
    %124 = vector.broadcast %1 : f32 to vector<8x128xf32>
    %125 = arith.subf %117, %124 : vector<8x128xf32>
    %126 = math.erf %125 : vector<8x128xf32>
    %127 = vector.broadcast %123 : f32 to vector<8x128xf32>
    %128 = arith.mulf %127, %126 : vector<8x128xf32>
    %129 = arith.addf %114, %128 : vector<8x128xf32>
    %130 = arith.mulf %4, %129 : vector<8x128xf32>
    %131 = arith.subf %122, %130 : vector<8x128xf32>
    %c0_2 = arith.constant 0 : index
    %c0_3 = arith.constant 0 : index
    %132 = vector.load %arg3[%c0_2, %c0_3] : memref<8x128xf32, #tpu.memory_space<vmem>>, vector<8x128xf32>
    tpu.vector_store %arg3[%c0_2, %c0_3], %131 {strides = array<i32>} : memref<8x128xf32, #tpu.memory_space<vmem>>, vector<8x128xf32>,
    return
  }
  func.func @transform_0(%arg0: i32, %arg1: memref<28xf32, #tpu.memory_space<smem>>) -> (i32, i32) {
    %c0_i32 = arith.constant 0 : i32
    %c0_i32_0 = arith.constant 0 : i32
    return %arg0, %c0_i32 : i32, i32
  }
  func.func @transform_1(%arg0: i32, %arg1: memref<28xf32, #tpu.memory_space<smem>>) -> (i32, i32) {
    %c0_i32 = arith.constant 0 : i32
    %c0_i32_0 = arith.constant 0 : i32
    return %arg0, %c0_i32 : i32, i32
  }
}

</mosaic_0001>

<llo_original>
// kernel: tpu_custom_call.1
$region0: #{tpu_custom_call.1}
  #allocation0 [shape = 'u32[]', space=smem, size = 0x4, offset = 0x4, fixed_abs, tag = 'smem constant byte address 0x4 - core index']
  #allocation1 [shape = 'u32[144,128]{1,0:T(1,128)}', space=vmem, size = 0x12000, scoped, tag = 'internal scratch']
  #allocation2 [shape = 's32[1]{0}', space=sflag, size = 0x4, scoped, tag = 'scoped memory for tpu_custom_call.1']
  #allocation3 [shape = 'u8[512]{0}', space=smem, size = 0x200, scoped, tag = 'prefetched SMEM operand 0']
  %s0 = inlined_call_operand.hbm [shape: f32[28], index: 0, kind: input, shape index: {}]
  %s1 = inlined_call_operand.hbm [shape: f32[8,128], index: 1, kind: input, shape index: {}]
  %s2 = inlined_call_operand.hbm [shape: f32[8,128], index: 2, kind: output, shape index: {}]
  %s3 = sld [smem:[#allocation0]]
  $region18: #{tpu_custom_call.1} parent=0
    _
  %s5 = ssub.s32 1, %s3
  %s6 = scalar_select 0, %s5, %s3
  %8 = dma.hbm_to_smem %s0, 16, [#allocation3], [#allocation2]
  %9 = dma.done [#allocation2], 16
  %10 = sfence
  $region1: #{tpu_custom_call.1} parent=0
    #allocation4 [shape = 'u8[4096]{0}', space=vmem, size = 0x1000, scoped, tag = 'input window, operand 1, single buffered']
    #allocation5 [shape = 's32[1]{0}', space=sflag, size = 0x4, scoped, tag = 'scoped memory for tpu_custom_call.1']
    #allocation6 [shape = 's32[1]{0}', space=sflag, size = 0x4, scoped, tag = 'scoped memory for tpu_custom_call.1']
    #allocation7 [shape = 'u8[4096]{0}', space=vmem, size = 0x1000, scoped, tag = 'output window, operand 0, single buffered']
    %11 = vsyncpa [#allocation5], 0
    %12 = vsyncpa [#allocation6], 0
    // Predicated region
    $region2: #{tpu_custom_call.1} parent=1 // pred_check
      _
    $region3: #{tpu_custom_call.1} parent=1 // pred_check_branch
      %14 = sbr.rel (0) target = $region5
    $region4: #{tpu_custom_call.1} parent=1 // pred_region
      %s16 = ssub.s32 128, 128
      %17 = vsyncadd [#allocation5], %s16
      %s19 = sshll.u32 [#allocation4], 4
      %s20 = int_to_ptr.vmem [resolvable:$true] %s19
      %22 = dma.hbm_to_vmem [thread:$0]  %s1, 128, %s20, [#allocation5]
    $region5: #{tpu_custom_call.1} parent=1 // pred_fallthru
      _
    // Predicated region
    $region6: #{tpu_custom_call.1} parent=1 // pred_check
      _
    $region7: #{tpu_custom_call.1} parent=1 // pred_check_branch
      %24 = sbr.rel (0) target = $region9
    $region8: #{tpu_custom_call.1} parent=1 // pred_region
      %25 = dma.done [#allocation5], 128
    $region9: #{tpu_custom_call.1} parent=1 // pred_fallthru
      _
    %s26 = sld [smem:[#allocation3]]
    %s27 = sld [smem:[#allocation3 + $0x1]]
    %s28 = sld [smem:[#allocation3 + $0x2]]
    %s29 = sld [smem:[#allocation3 + $0x3]]
    %v30 = vld [vmem:[#allocation4] sm:$0xff]
    %v31 = vlog2.pop %v30
    %v32 = vmul.f32 %v31, 0.6931472
    %v33 = vstv %s26
    %v34 = vmul.f32 %v32, %v33
    %s35 = sld [smem:[#allocation3 + $0x4]]
    %v36 = vstv %s35
    %v37 = vsub.f32 %v36, %v34
    %s38 = sld [smem:[#allocation3 + $0xc]]
    %v39 = verf.f32.pop %v37
    %v40 = vstv %s38
    %v41 = vmul.f32 %v40, %v39
    %v42 = vstv %s28
    %v43 = vadd.f32 %v42, %v41
    %s44 = sld [smem:[#allocation3 + $0x14]]
    %v45 = vstv %s27
    %v46 = vsub.f32 %v37, %v45
    %v47 = verf.f32.pop %v46
    %v48 = vstv %s44
    %v49 = vmul.f32 %v48, %v47
    %v50 = vstv %s29
    %v51 = vadd.f32 %v50, %v49
    %s52 = sld [smem:[#allocation3 + $0x5]]
    %v53 = vstv %s52
    %v54 = vsub.f32 %v53, %v34
    %s55 = sld [smem:[#allocation3 + $0xd]]
    %v56 = verf.f32.pop %v54
    %v57 = vstv %s55
    %v58 = vmul.f32 %v57, %v56
    %v59 = vadd.f32 %v43, %v58
    %s60 = sld [smem:[#allocation3 + $0x15]]
    %v61 = vsub.f32 %v54, %v45
    %v62 = verf.f32.pop %v61
    %v63 = vstv %s60
    %v64 = vmul.f32 %v63, %v62
    %v65 = vadd.f32 %v51, %v64
    %s66 = sld [smem:[#allocation3 + $0x6]]
    %v67 = vstv %s66
    %v68 = vsub.f32 %v67, %v34
    %s69 = sld [smem:[#allocation3 + $0xe]]
    %v70 = verf.f32.pop %v68
    %v71 = vstv %s69
    %v72 = vmul.f32 %v71, %v70
    %v73 = vadd.f32 %v59, %v72
    %s74 = sld [smem:[#allocation3 + $0x16]]
    %v75 = vsub.f32 %v68, %v45
    %v76 = verf.f32.pop %v75
    %v77 = vstv %s74
    %v78 = vmul.f32 %v77, %v76
    %v79 = vadd.f32 %v65, %v78
    %s80 = sld [smem:[#allocation3 + $0x7]]
    %v81 = vstv %s80
    %v82 = vsub.f32 %v81, %v34
    %s83 = sld [smem:[#allocation3 + $0xf]]
    %v84 = verf.f32.pop %v82
    %v85 = vstv %s83
    %v86 = vmul.f32 %v85, %v84
    %v87 = vadd.f32 %v73, %v86
    %s88 = sld [smem:[#allocation3 + $0x17]]
    %v89 = vsub.f32 %v82, %v45
    %v90 = verf.f32.pop %v89
    %v91 = vstv %s88
    %v92 = vmul.f32 %v91, %v90
    %v93 = vadd.f32 %v79, %v92
    %s94 = sld [smem:[#allocation3 + $0x8]]
    %v95 = vstv %s94
    %v96 = vsub.f32 %v95, %v34
    %s97 = sld [smem:[#allocation3 + $0x10]]
    %v98 = verf.f32.pop %v96
    %v99 = vstv %s97
    %v100 = vmul.f32 %v99, %v98
    %v101 = vadd.f32 %v87, %v100
    %s102 = sld [smem:[#allocation3 + $0x18]]
    %v103 = vsub.f32 %v96, %v45
    %v104 = verf.f32.pop %v103
    %v105 = vstv %s102
    %v106 = vmul.f32 %v105, %v104
    %v107 = vadd.f32 %v93, %v106
    %s108 = sld [smem:[#allocation3 + $0x9]]
    %v109 = vstv %s108
    %v110 = vsub.f32 %v109, %v34
    %s111 = sld [smem:[#allocation3 + $0x11]]
    %v112 = verf.f32.pop %v110
    %v113 = vstv %s111
    %v114 = vmul.f32 %v113, %v112
    %v115 = vadd.f32 %v101, %v114
    %s116 = sld [smem:[#allocation3 + $0x19]]
    %v117 = vsub.f32 %v110, %v45
    %v118 = verf.f32.pop %v117
    %v119 = vstv %s116
    %v120 = vmul.f32 %v119, %v118
    %v121 = vadd.f32 %v107, %v120
    %s122 = sld [smem:[#allocation3 + $0xa]]
    %v123 = vstv %s122
    %v124 = vsub.f32 %v123, %v34
    %s125 = sld [smem:[#allocation3 + $0x12]]
    %v126 = verf.f32.pop %v124
    %v127 = vstv %s125
    %v128 = vmul.f32 %v127, %v126
    %v129 = vadd.f32 %v115, %v128
    %s130 = sld [smem:[#allocation3 + $0x1a]]
    %v131 = vsub.f32 %v124, %v45
    %v132 = verf.f32.pop %v131
    %v133 = vstv %s130
    %v134 = vmul.f32 %v133, %v132
    %v135 = vadd.f32 %v121, %v134
    %s136 = sld [smem:[#allocation3 + $0xb]]
    %v137 = vstv %s136
    %v138 = vsub.f32 %v137, %v34
    %s139 = sld [smem:[#allocation3 + $0x13]]
    %v140 = verf.f32.pop %v138
    %v141 = vstv %s139
    %v142 = vmul.f32 %v141, %v140
    %v143 = vadd.f32 %v129, %v142
    %s144 = sld [smem:[#allocation3 + $0x1b]]
    %v145 = vsub.f32 %v138, %v45
    %v146 = verf.f32.pop %v145
    %v147 = vstv %s144
    %v148 = vmul.f32 %v147, %v146
    %v149 = vadd.f32 %v135, %v148
    %v150 = vmul.f32 %v30, %v149
    %v151 = vsub.f32 %v143, %v150
    %152 = vst [vmem:[#allocation7] sm:$0xff] %v151
    // Predicated region
    $region10: #{tpu_custom_call.1} parent=1 // pred_check
      _
    $region11: #{tpu_custom_call.1} parent=1 // pred_check_branch
      %154 = sbr.rel (0) target = $region13
    $region12: #{tpu_custom_call.1} parent=1 // pred_region
      %s156 = ssub.s32 128, 128
      %157 = vsyncadd [#allocation6], %s156
      %s159 = sshll.u32 [#allocation7], 4
      %s160 = int_to_ptr.vmem [resolvable:$true] %s159
      %162 = dma.vmem_to_hbm [thread:$0]  %s160, 128, %s2, [#allocation6]
    $region13: #{tpu_custom_call.1} parent=1 // pred_fallthru
      _
    // Predicated region
    $region14: #{tpu_custom_call.1} parent=1 // pred_check
      _
    $region15: #{tpu_custom_call.1} parent=1 // pred_check_branch
      %164 = sbr.rel (0) target = $region17
    $region16: #{tpu_custom_call.1} parent=1 // pred_region
      %165 = dma.done [#allocation6], 128
    $region17: #{tpu_custom_call.1} parent=1 // pred_fallthru
      _
    %166 = vsyncpa [#allocation5], 1
    %167 = vsyncpa [#allocation6], 1

</llo_original>
